<compile_context>
chip_gen: v6e
topology: v6e:2x2x1
jax: 0.10.0
libtpu: 0.0.40
codegen_flags: <defaults>
</compile_context>

<pallas_src>
import jax
import jax.numpy as jnp
from jax import lax
from jax.experimental import pallas as pl
from jax.experimental.pallas import tpu as pltpu


def _round_up(n, m):
    return ((n + m - 1) // m) * m


def _fused_kernel(x_ref, wft_ref, bf_ref, o_ref):
    # out_t[c, t] = sum_d Wf^T[c, d] * x[t, d]   -- single MXU matmul, f32 acc.
    # NT dimension numbers (contract last dim of both operands); lowers to a
    # native transposed-RHS matmul (same pattern as q @ k^T in flash attn).
    out_t = lax.dot_general(
        wft_ref[...], x_ref[...],
        dimension_numbers=(((1,), (1,)), ((), ())),
        preferred_element_type=jnp.float32)          # (C, TB)
    out_t = out_t + bf_ref[...]                      # (C, 1) broadcast over lanes
    o_ref[...] = 1.0 / (1.0 + jnp.exp(-out_t))       # sigmoid (exp -> EUP slot)


def prepare_params(w1, b1, w2, b2):
    """One-time parameter prep.

    Expects weights already in (in, out) layout:
      w1: (D, H), b1: (H,), w2: (H, C), b2: (C,)
    (Raw PyTorch nn.Linear weights are (out, in) and must be transposed by
     the caller.)  Because the reference module has no nonlinearity between
    the two Linears, they are folded offline:  Wf = W1 @ W2,  bf = b1 @ W2 + b2.
    """
    w1 = jnp.asarray(w1, jnp.float32)
    b1 = jnp.asarray(b1, jnp.float32)
    w2 = jnp.asarray(w2, jnp.float32)
    b2 = jnp.asarray(b2, jnp.float32)
    wf_t = (w1 @ w2).T                          # (C, D) -- lhs of the NT matmul
    bf = (b1 @ w2 + b2).reshape(-1, 1)          # (C, 1) -- column bias
    return wf_t, bf


def _choose_tb(B, tb):
    """Batch tile: single exempt block for tiny B; otherwise a multiple of 128
    (lane-dense transposed output), capped at ceil(B/2) so the grid has >= 2
    steps for v7x's two TensorCores, and at `tb` for VMEM / pipelining."""
    if B <= 128:
        return B                                 # block dims == full dims (exempt)
    tb = max(128, (tb // 128) * 128)
    half = _round_up(-(-B // 2), 128)            # ceil(B/2) rounded up to 128
    return min(tb, half)


def top_model_forward(x, params, *, tb=4096):
    """x: (B, D) f32; params from prepare_params().  tb: max batch tile
    (4096 default; ~8192 is fine on v7x, still well inside scoped VMEM)."""
    wf_t, bf = params
    x = jnp.asarray(x, jnp.float32)
    B, D = x.shape
    C = wf_t.shape[0]

    TB = _choose_tb(B, tb)
    grid = (pl.cdiv(B, TB),)                     # ragged edge block is masked

    out_t = pl.pallas_call(
        _fused_kernel,
        out_shape=jax.ShapeDtypeStruct((C, B), jnp.float32),   # transposed, lane-dense
        grid=grid,
        in_specs=[
            pl.BlockSpec((TB, D), lambda i: (i, 0)),   # x: streamed per tile (D=89 full)
            pl.BlockSpec((C, D), lambda i: (0, 0)),    # fused Wf^T: VMEM-resident
            pl.BlockSpec((C, 1), lambda i: (0, 0)),    # fused bias column
        ],
        out_specs=pl.BlockSpec((C, TB), lambda i: (0, i)),
        compiler_params=pltpu.CompilerParams(
            dimension_semantics=("parallel",),         # megacore sharding on v7x
        ),
    )(x, wf_t, bf)

    # Transpose back to (B, C) (trivial 8*B-byte XLA op), then torch.squeeze().
    return jnp.squeeze(out_t.T)


def init_params(key, input_dim=89, hidden=128, num_classes=2):
    """Deterministic init mimicking PyTorch nn.Linear default U[-1/sqrt(fan_in), +]."""
    k1, k2, k3, k4 = jax.random.split(key, 4)
    bound1 = 1.0 / jnp.sqrt(input_dim)
    w1 = jax.random.uniform(k1, (input_dim, hidden), jnp.float32, -bound1, bound1)
    b1 = jax.random.uniform(k2, (hidden,), jnp.float32, -bound1, bound1)
    bound2 = 1.0 / jnp.sqrt(hidden)
    w2 = jax.random.uniform(k3, (hidden, num_classes), jnp.float32, -bound2, bound2)
    b2 = jax.random.uniform(k4, (num_classes,), jnp.float32, -bound2, bound2)
    return w1, b1, w2, b2


if __name__ == "__main__":
    key = jax.random.PRNGKey(0)
    kx, kx2, kp = jax.random.split(key, 3)

    # Matches module defaults: input_dim=89, hidden_units=[128], num_classes=2.
    B, D, H, C = 8, 89, 128, 2
    w1, b1, w2, b2 = init_params(kp, D, H, C)
    params = prepare_params(w1, b1, w2, b2)      # one-time layer fusion

    def ref(xv):
        return jax.nn.sigmoid((xv @ w1 + b1) @ w2 + b2).squeeze()

    # Small single-block case.
    x = jax.random.normal(kx, (B, D), jnp.float32)
    y = jax.block_until_ready(top_model_forward(x, params))
    y_ref = ref(x)
    assert y.shape == y_ref.shape
    assert jnp.allclose(y, y_ref, atol=1e-5), "mismatch vs reference (small batch)"

    # Multi-tile + ragged edge block case (exercises masked edge reads/writes).
    B2 = 300
    x2 = jax.random.normal(kx2, (B2, D), jnp.float32)
    y2 = jax.block_until_ready(top_model_forward(x2, params))
    y2_ref = ref(x2)
    assert y2.shape == y2_ref.shape
    assert jnp.allclose(y2, y2_ref, atol=1e-5), "mismatch vs reference (ragged batch)"

    print("KERNEL_OK")
</pallas_src>

<mosaic_0001>
module attributes {stable_mosaic.version = 11 : i64} {
  func.func @_fused_kernel(%arg0: i32, %arg1: memref<8x89xf32, #tpu.memory_space<vmem>>, %arg2: memref<2x89xf32, #tpu.memory_space<vmem>>, %arg3: memref<2x1xf32, #tpu.memory_space<vmem>>, %arg4: memref<2x8xf32, #tpu.memory_space<vmem>>) attributes {dimension_semantics = [#tpu.dimension_semantics<parallel>], iteration_bounds = array<i64: 1>, scalar_prefetch = 0 : i64, scratch_operands = 0 : i64, tpu.core_type = #tpu.core_type<tc>, window_params = [{transform_indices = @transform_0, window_bounds = array<i64: 8, 89>}, {pipeline_mode = #tpu.pipeline_mode<synchronous>, transform_indices = @transform_1, window_bounds = array<i64: 2, 89>}, {pipeline_mode = #tpu.pipeline_mode<synchronous>, transform_indices = @transform_2, window_bounds = array<i64: 2, 1>}, {transform_indices = @transform_3, window_bounds = array<i64: 2, 8>}]} {
    %c0 = arith.constant 0 : index
    %c0_0 = arith.constant 0 : index
    %0 = vector.load %arg2[%c0, %c0_0] : memref<2x89xf32, #tpu.memory_space<vmem>>, vector<2x89xf32>
    %c0_1 = arith.constant 0 : index
    %c0_2 = arith.constant 0 : index
    %1 = vector.load %arg1[%c0_1, %c0_2] : memref<8x89xf32, #tpu.memory_space<vmem>>, vector<8x89xf32>
    %cst = arith.constant dense<0.000000e+00> : vector<2x8xf32>
    %2 = tpu.matmul %0, %1, %cst {dimension_numbers = #tpu.dot_dimension_numbers<[1], [1], [0], [0], [0, 0, 1, 0], [], []>} : vector<2x89xf32>, vector<8x89xf32>, vector<2x8xf32> -> vector<2x8xf32>
    %c0_3 = arith.constant 0 : index
    %c0_4 = arith.constant 0 : index
    %3 = vector.load %arg3[%c0_3, %c0_4] : memref<2x1xf32, #tpu.memory_space<vmem>>, vector<2x1xf32>
    %4 = vector.broadcast %3 : vector<2x1xf32> to vector<2x8xf32>
    %5 = arith.addf %2, %4 : vector<2x8xf32>
    %cst_5 = arith.constant 0.000000e+00 : f32
    %6 = vector.broadcast %cst_5 : f32 to vector<2x8xf32>
    %7 = arith.subf %6, %5 : vector<2x8xf32>
    %8 = math.exp %7 : vector<2x8xf32>
    %cst_6 = arith.constant 1.000000e+00 : f32
    %9 = vector.broadcast %cst_6 : f32 to vector<2x8xf32>
    %10 = arith.addf %9, %8 : vector<2x8xf32>
    %cst_7 = arith.constant 1.000000e+00 : f32
    %11 = vector.broadcast %cst_7 : f32 to vector<2x8xf32>
    %12 = arith.divf %11, %10 : vector<2x8xf32>
    %c0_8 = arith.constant 0 : index
    %c0_9 = arith.constant 0 : index
    %13 = vector.load %arg4[%c0_8, %c0_9] : memref<2x8xf32, #tpu.memory_space<vmem>>, vector<2x8xf32>
    tpu.vector_store %arg4[%c0_8, %c0_9], %12 {strides = array<i32>} : memref<2x8xf32, #tpu.memory_space<vmem>>, vector<2x8xf32>,
    return
  }
  func.func @transform_0(%arg0: i32) -> (i32, i32) {
    %c0_i32 = arith.constant 0 : i32
    %c0_i32_0 = arith.constant 0 : i32
    return %arg0, %c0_i32 : i32, i32
  }
  func.func @transform_1(%arg0: i32) -> (i32, i32) {
    %c0_i32 = arith.constant 0 : i32
    %c0_i32_0 = arith.constant 0 : i32
    %c0_i32_1 = arith.constant 0 : i32
    return %c0_i32, %c0_i32_0 : i32, i32
  }
  func.func @transform_2(%arg0: i32) -> (i32, i32) {
    %c0_i32 = arith.constant 0 : i32
    %c0_i32_0 = arith.constant 0 : i32
    %c0_i32_1 = arith.constant 0 : i32
    return %c0_i32, %c0_i32_0 : i32, i32
  }
  func.func @transform_3(%arg0: i32) -> (i32, i32) {
    %c0_i32 = arith.constant 0 : i32
    %c0_i32_0 = arith.constant 0 : i32
    return %c0_i32, %arg0 : i32, i32
  }
}

</mosaic_0001>

<llo_original>
// kernel: tpu_custom_call.1
$region0: #{tpu_custom_call.1}
  #allocation0 [shape = 'u32[]', space=smem, size = 0x4, offset = 0x4, fixed_abs, tag = 'smem constant byte address 0x4 - core index']
  #allocation1 [shape = 'u32[144,128]{1,0:T(1,128)}', space=vmem, size = 0x12000, scoped, tag = 'internal scratch']
  %s0 = inlined_call_operand.hbm [shape: f32[8,89], index: 0, kind: input, shape index: {}]
  %s1 = inlined_call_operand.vmem [shape: f32[2,89], index: 1, kind: input, shape index: {}]
  %s2 = inlined_call_operand.vmem [shape: f32[2,1], index: 2, kind: input, shape index: {}]
  %s3 = inlined_call_operand.hbm [shape: f32[2,8], index: 3, kind: output, shape index: {}]
  %s4 = sld [smem:[#allocation0]]
  $region26: #{tpu_custom_call.1} parent=0
    _
  %s6 = ssub.s32 1, %s4
  %s7 = scalar_select 0, %s6, %s4
  $region1: #{tpu_custom_call.1} parent=0
    #allocation2 [shape = 'u8[4096]{0}', space=vmem, size = 0x1000, scoped, tag = 'input window, operand 0, single buffered']
    #allocation3 [shape = 's32[1]{0}', space=sflag, size = 0x4, scoped, tag = 'scoped memory for tpu_custom_call.1']
    #allocation4 [shape = 's32[1]{0}', space=sflag, size = 0x4, scoped, tag = 'scoped memory for tpu_custom_call.1']
    #allocation5 [shape = 'u8[1024]{0}', space=vmem, size = 0x400, scoped, tag = 'output window, operand 0, single buffered']
    %8 = vsyncpa [#allocation3], 0
    %9 = vsyncpa [#allocation4], 0
    // Predicated region
    $region2: #{tpu_custom_call.1} parent=1 // pred_check
      _
    $region3: #{tpu_custom_call.1} parent=1 // pred_check_branch
      %11 = sbr.rel (0) target = $region5
    $region4: #{tpu_custom_call.1} parent=1 // pred_region
      %s13 = ssub.s32 128, 128
      %14 = vsyncadd [#allocation3], %s13
      %s16 = sshll.u32 [#allocation2], 4
      %s17 = int_to_ptr.vmem [resolvable:$true] %s16
      %19 = dma.hbm_to_vmem [thread:$0]  %s0, 128, %s17, [#allocation3]
    $region5: #{tpu_custom_call.1} parent=1 // pred_fallthru
      _
    // Predicated region
    $region6: #{tpu_custom_call.1} parent=1 // pred_check
      _
    $region7: #{tpu_custom_call.1} parent=1 // pred_check_branch
      %21 = sbr.rel (0) target = $region9
    $region8: #{tpu_custom_call.1} parent=1 // pred_region
      _
    $region9: #{tpu_custom_call.1} parent=1 // pred_fallthru
      _
    // Predicated region
    $region10: #{tpu_custom_call.1} parent=1 // pred_check
      _
    $region11: #{tpu_custom_call.1} parent=1 // pred_check_branch
      %23 = sbr.rel (0) target = $region13
    $region12: #{tpu_custom_call.1} parent=1 // pred_region
      _
    $region13: #{tpu_custom_call.1} parent=1 // pred_fallthru
      _
    // Predicated region
    $region14: #{tpu_custom_call.1} parent=1 // pred_check
      _
    $region15: #{tpu_custom_call.1} parent=1 // pred_check_branch
      %25 = sbr.rel (0) target = $region17
    $region16: #{tpu_custom_call.1} parent=1 // pred_region
      %26 = dma.done [#allocation3], 128
    $region17: #{tpu_custom_call.1} parent=1 // pred_fallthru
      _
    %v27 = vld [vmem:[%s1] sm:$0x3]
    %v28 = vld [vmem:[#allocation2] sm:$0xff]
    %v29 = vld [vmem:[%s2] sm:$0x3]
    %31 = vset.pattern.permute.xlu0 0
    %32 = vperm.xlu0 %31, %v29
    %v33 = vpop.permute.xlu0 %32
    %vm35 = vcmask 728064
    %v37 = vsel %vm35, %v27, 0
    %v40 = vsel %vm35, %v28, 0
    %42 = vmatprep.subr.mxu0 0.0
    %43 = vmatpush1.xpose.msra.mxu0 0.0
    %44 = vmatprep.subr.mxu0 0.0
    %45 = vmatpush1.xpose.msra.mxu0 0.0
    %46 = vmatprep.subr.mxu0 0.0
    %47 = vmatpush1.xpose.msra.mxu0 0.0
    %48 = vmatprep.subr.mxu0 0.0
    %49 = vmatpush1.xpose.msra.mxu0 0.0
    %50 = vmatprep.subr.mxu0 0.0
    %51 = vmatpush1.xpose.msra.mxu0 0.0
    %52 = vmatprep.subr.mxu0 0.0
    %53 = vmatpush1.xpose.msra.mxu0 0.0
    %54 = vmatprep.subr.mxu0 0.0
    %55 = vmatpush1.xpose.msra.mxu0 0.0
    %56 = vmatprep.subr.mxu0 0.0
    %57 = vmatpush1.xpose.msra.mxu0 0.0
    %58 = vmatprep.subr.mxu0 0.0
    %59 = vmatpush1.xpose.msra.mxu0 0.0
    %60 = vmatprep.subr.mxu0 0.0
    %61 = vmatpush1.xpose.msra.mxu0 0.0
    %62 = vmatprep.subr.mxu0 0.0
    %63 = vmatpush1.xpose.msra.mxu0 0.0
    %64 = vmatprep.subr.mxu0 0.0
    %65 = vmatpush1.xpose.msra.mxu0 0.0
    %66 = vmatprep.subr.mxu0 0.0
    %67 = vmatpush1.xpose.msra.mxu0 0.0
    %68 = vmatprep.subr.mxu0 0.0
    %69 = vmatpush1.xpose.msra.mxu0 0.0
    %70 = vmatprep.subr.mxu0 0.0
    %71 = vmatpush1.xpose.msra.mxu0 0.0
    %72 = vmatprep.subr.mxu0 0.0
    %73 = vmatpush1.xpose.msra.mxu0 %v40
    %74 = vmatprep.subr.mxu0 0.0
    %75 = vmatpush2.xpose.msra.mxu0 0.0
    %76 = vmatprep.subr.mxu0 0.0
    %77 = vmatpush2.xpose.msra.mxu0 0.0
    %78 = vmatprep.subr.mxu0 0.0
    %79 = vmatpush2.xpose.msra.mxu0 0.0
    %80 = vmatprep.subr.mxu0 0.0
    %81 = vmatpush2.xpose.msra.mxu0 0.0
    %82 = vmatprep.subr.mxu0 0.0
    %83 = vmatpush2.xpose.msra.mxu0 0.0
    %84 = vmatprep.subr.mxu0 0.0
    %85 = vmatpush2.xpose.msra.mxu0 0.0
    %86 = vmatprep.subr.mxu0 0.0
    %87 = vmatpush2.xpose.msra.mxu0 0.0
    %88 = vmatprep.subr.mxu0 0.0
    %89 = vmatpush2.xpose.msra.mxu0 0.0
    %90 = vmatprep.subr.mxu0 0.0
    %91 = vmatpush2.xpose.msra.mxu0 0.0
    %92 = vmatprep.subr.mxu0 0.0
    %93 = vmatpush2.xpose.msra.mxu0 0.0
    %94 = vmatprep.subr.mxu0 0.0
    %95 = vmatpush2.xpose.msra.mxu0 0.0
    %96 = vmatprep.subr.mxu0 0.0
    %97 = vmatpush2.xpose.msra.mxu0 0.0
    %98 = vmatprep.subr.mxu0 0.0
    %99 = vmatpush2.xpose.msra.mxu0 0.0
    %100 = vmatprep.subr.mxu0 0.0
    %101 = vmatpush2.xpose.msra.mxu0 0.0
    %102 = vmatprep.subr.mxu0 0.0
    %103 = vmatpush2.xpose.msra.mxu0 0.0
    %104 = vmatprep.subr.mxu0 0.0
    %105 = vmatpush2.xpose.msra.mxu0 0.0
    %106 = vmatprep.mubr.f32.mxu0 0.0
    %107 = vmatmul.mubr.f32.gmra.mxu0 %v37
    %v108 = vpop.f32.mrf.mxu0
    %v109 = vadd.f32 %v33, %v108
    %v110 = vpop.f32.mrf.mxu0
    %111 = vdwg.mxu0
    %v112 = vsub.f32 0.0, %v109
    %v113 = vmul.f32 %v112, 1.442695
    %v114 = vpow.pop %v113
    %v115 = vadd.f32 %v114, 1.0
    %v116 = vrcp.pop %v115
    %v117 = vmul.f32 1.0, %v116
    %vm118 = vcmask 58368
    %119 = vst.msk [vmem:[#allocation5] sm:$0x3] %vm118, %v117
    // Predicated region
    $region18: #{tpu_custom_call.1} parent=1 // pred_check
      _
    $region19: #{tpu_custom_call.1} parent=1 // pred_check_branch
      %121 = sbr.rel (0) target = $region21
    $region20: #{tpu_custom_call.1} parent=1 // pred_region
      %s123 = ssub.s32 32, 32
      %124 = vsyncadd [#allocation4], %s123
      %s126 = sshll.u32 [#allocation5], 4
      %s127 = int_to_ptr.vmem [resolvable:$true] %s126
      %129 = dma.vmem_to_hbm [thread:$0]  %s127, 32, %s3, [#allocation4]
    $region21: #{tpu_custom_call.1} parent=1 // pred_fallthru
      _
    // Predicated region
    $region22: #{tpu_custom_call.1} parent=1 // pred_check
      _
    $region23: #{tpu_custom_call.1} parent=1 // pred_check_branch
      %131 = sbr.rel (0) target = $region25
    $region24: #{tpu_custom_call.1} parent=1 // pred_region
      %132 = dma.done [#allocation4], 32
    $region25: #{tpu_custom_call.1} parent=1 // pred_fallthru
      _
    %133 = vsyncpa [#allocation3], 1
    %134 = vsyncpa [#allocation4], 1

</llo_original>
